<compile_context>
chip_gen: v5e
topology: v5e:2x2
jax: 0.10.0
libtpu: 0.0.40
codegen_flags: <defaults>
</compile_context>

<pallas_src>
import functools

import jax
import jax.numpy as jnp
from jax.experimental import pallas as pl
from jax.experimental.pallas import tpu as pltpu


def _round_up(v, m):
    return ((v + m - 1) // m) * m


def _sublane(dtype):
    # Rows packed per vreg: f32 -> 8, bf16 -> 16, int8/fp8 -> 32.
    return max(8, 32 // jnp.dtype(dtype).itemsize)


def _vmem_capacity_bytes():
    # Capability query only; default conservatively to the smallest (v7x) VMEM.
    try:
        return int(pltpu.get_tpu_info().vmem_capacity_bytes)
    except Exception:
        return 64 << 20


# ----------------------------- kernels ---------------------------------------


def _fused_mlp_kernel(*refs, num_layers, relu_mask, compute_dtype):
    # refs = (x_ref, w0, b0, w1, b1, ..., o_ref); all weights resident in VMEM.
    x_ref, o_ref = refs[0], refs[-1]
    prm = refs[1:-1]
    h = x_ref[...]                                     # compute_dtype operand
    for li in range(num_layers):
        w_ref, b_ref = prm[2 * li], prm[2 * li + 1]
        acc = jnp.dot(h, w_ref[...], preferred_element_type=jnp.float32)  # MXU
        acc = acc + b_ref[...]                          # f32 bias add (VPU)
        if relu_mask[li]:
            acc = jnp.maximum(acc, 0.0)
        # Downcast hidden activations immediately: halves inter-layer VMEM
        # traffic; the next dot needs compute_dtype operands anyway.
        h = acc.astype(compute_dtype) if li < num_layers - 1 else acc
    # output_activation = Identity (module default) -> nothing to apply.
    o_ref[...] = h.astype(o_ref.dtype)


def _linear_kernel(x_ref, w_ref, b_ref, o_ref, *, relu):
    # One streamed layer: W tiled over the output-feature grid axis.
    acc = jnp.dot(x_ref[...], w_ref[...], preferred_element_type=jnp.float32)
    acc = acc + b_ref[...]
    if relu:
        acc = jnp.maximum(acc, 0.0)
    o_ref[...] = acc.astype(o_ref.dtype)


# ----------------------------- module wrapper ---------------------------------


class PallasMLP:
    """Fused MLP forward.  params: list of (W:(in,out), b:(1,out))."""

    def __init__(self, params, relu_mask, *, compute_dtype=jnp.bfloat16,
                 out_dtype=None, block_n=None, act_buffers=2,
                 force_streaming=False):
        assert len(params) == len(relu_mask) and len(params) > 0
        self.compute_dtype = jnp.dtype(compute_dtype)
        self.out_dtype = out_dtype            # None -> follow x.dtype per call
        self.relu_mask = tuple(bool(m) for m in relu_mask)
        self.num_layers = len(params)
        self.block_n = block_n
        self.act_buffers = int(act_buffers)   # sweep 2 vs 3 for thin MLPs
        self.in_dim = int(params[0][0].shape[0])
        self.out_dim = int(params[-1][0].shape[1])

        # ---- pad all feature dims to multiples of 128 ONCE (hoisted out of
        # the per-call hot path; lane-dense loads/stores, no vst.msk). --------
        self.padded = []
        d_in = self.in_dim
        for (w, b) in params:
            assert int(w.shape[0]) == d_in
            d_out = int(w.shape[1])
            in_p, out_p = _round_up(d_in, 128), _round_up(d_out, 128)
            w_p = jnp.zeros((in_p, out_p), self.compute_dtype)
            w_p = w_p.at[:d_in, :d_out].set(jnp.asarray(w, self.compute_dtype))
            b_p = jnp.zeros((1, out_p), jnp.float32)
            b_p = b_p.at[:, :d_out].set(jnp.asarray(b, jnp.float32).reshape(1, d_out))
            self.padded.append((w_p, b_p))
            d_in = d_out
        self.in_pad = int(self.padded[0][0].shape[0])
        self.out_pads = [int(w_p.shape[1]) for (w_p, _) in self.padded]
        self.out_pad = self.out_pads[-1]
        self.max_feat = max([self.in_pad] + self.out_pads)
        self.flops_per_row = 2 * sum(int(w.shape[0]) * int(w.shape[1])
                                     for (w, _) in params)

        # ---- device VMEM budget (cap at real capacity, ~8 MiB headroom) -----
        self.vmem_cap = _vmem_capacity_bytes()
        self.vmem_budget = max(self.vmem_cap - (8 << 20), 16 << 20)
        wi = self.compute_dtype.itemsize
        self.weight_bytes = sum(w_p.size * wi + b_p.size * 4
                                for (w_p, b_p) in self.padded)
        # Stream weights when the all-resident set would crowd out activation
        # double-buffers (>~60% of usable VMEM; e.g. v7x 64 MiB).
        self.use_streaming = force_streaming or (
            self.weight_bytes > int(0.6 * self.vmem_budget))

        # Does this Pallas build accept pipeline_mode=Buffered(1)?  (Constant
        # block-index weights -> single buffer halves their VMEM footprint.)
        try:
            pl.BlockSpec((8, 128), lambda i: (i, 0), pipeline_mode=pl.Buffered(1))
            self._buffered_ok = True
        except (TypeError, AttributeError, NotImplementedError):
            self._buffered_ok = False

        self._call_cache = {}

    # ------------------------- tile selection --------------------------------

    def _choose_block_n_fused(self, n_rows, out_itemsize):
        sl = _sublane(self.compute_dtype)
        if self.block_n is not None:
            return _round_up(self.block_n, sl)
        if n_rows <= 128:
            # Tiny batch: one tile, rounded to dtype sublane packing (16 bf16).
            return _round_up(max(n_rows, sl), sl)
        wi = self.compute_dtype.itemsize
        # Budget the tile assuming worst-case double-buffered weights.
        avail = max(self.vmem_budget - 2 * self.weight_bytes, 8 << 20)
        per_row = (self.act_buffers * self.in_pad * wi      # x buffers
                   + 2 * self.out_pad * out_itemsize        # out buffers
                   + self.max_feat * 4)                     # f32 accumulator
        bn = 128
        for cand in (1024, 512, 256, 128):                  # big tiles on 128 MiB chips
            if cand * per_row <= avail:
                bn = cand
                break
        # Keep >=2 grid steps so both v7x TensorCores get work.
        while bn > 128 and pl.cdiv(n_rows, bn) < 2:
            bn //= 2
        return bn

    def _choose_block_n_streaming(self, n_rows):
        sl = _sublane(self.compute_dtype)
        if self.block_n is not None:
            return _round_up(self.block_n, sl)
        if n_rows <= 128:
            return _round_up(max(n_rows, sl), sl)
        bn = 256
        while bn > 128 and pl.cdiv(n_rows, bn) < 2:
            bn //= 2
        return bn

    def _choose_tn(self, in_p, out_p, bn):
        wi = self.compute_dtype.itemsize
        for tn in (1024, 512, 256, 128):
            if out_p % tn:
                continue
            need = (2 * bn * in_p * wi        # x double buffer
                    + 2 * in_p * tn * wi      # streamed W double buffer
                    + 2 * tn * 4              # bias double buffer
                    + 2 * bn * tn * 4)        # out double buffer (<= f32)
            if need <= self.vmem_budget:
                return tn
        return 128

    # ------------------------- builders ---------------------------------------

    def _build_fused(self, n_pad, bn, out_dtype, use_buffered):
        out_itemsize = jnp.dtype(out_dtype).itemsize
        wi = self.compute_dtype.itemsize

        if use_buffered and self.act_buffers != 2:
            x_spec = pl.BlockSpec((bn, self.in_pad), lambda i: (i, 0),
                                  pipeline_mode=pl.Buffered(self.act_buffers))
        else:
            x_spec = pl.BlockSpec((bn, self.in_pad), lambda i: (i, 0))
        in_specs = [x_spec]
        for (w_p, b_p) in self.padded:
            if use_buffered:
                # Constant block index across the grid -> single-buffered
                # weights/biases (halves their VMEM footprint, key on v7x).
                in_specs.append(pl.BlockSpec(w_p.shape, lambda i: (0, 0),
                                             pipeline_mode=pl.Buffered(1)))
                in_specs.append(pl.BlockSpec(b_p.shape, lambda i: (0, 0),
                                             pipeline_mode=pl.Buffered(1)))
            else:
                in_specs.append(pl.BlockSpec(w_p.shape, lambda i: (0, 0)))
                in_specs.append(pl.BlockSpec(b_p.shape, lambda i: (0, 0)))

        wf = 1 if use_buffered else 2
        tile_bytes = (self.act_buffers * bn * self.in_pad * wi
                      + 2 * bn * self.out_pad * out_itemsize
                      + 2 * bn * self.max_feat * 4)
        need = wf * self.weight_bytes + tile_bytes + (4 << 20)
        vmem_limit = min(self.vmem_budget,
                         max(need, min(32 << 20, self.vmem_budget)))

        flops = self.flops_per_row * n_pad
        bytes_accessed = (n_pad * self.in_pad * wi
                          + self.weight_bytes
                          + n_pad * self.out_pad * out_itemsize)
        kernel = functools.partial(_fused_mlp_kernel,
                                   num_layers=self.num_layers,
                                   relu_mask=self.relu_mask,
                                   compute_dtype=self.compute_dtype)
        return pl.pallas_call(
            kernel,
            out_shape=jax.ShapeDtypeStruct((n_pad, self.out_pad), out_dtype),
            grid_spec=pltpu.PrefetchScalarGridSpec(
                num_scalar_prefetch=0,
                grid=(n_pad // bn,),
                in_specs=in_specs,
                out_specs=pl.BlockSpec((bn, self.out_pad), lambda i: (i, 0)),
            ),
            compiler_params=pltpu.CompilerParams(
                dimension_semantics=("parallel",),
                vmem_limit_bytes=int(vmem_limit)),
            cost_estimate=pl.CostEstimate(flops=int(flops), transcendentals=0,
                                          bytes_accessed=int(bytes_accessed)),
        )

    def _build_layer_call(self, n_pad, bn, in_p, out_p, tn, relu, out_dtype):
        wi = self.compute_dtype.itemsize
        need = (2 * bn * in_p * wi + 2 * in_p * tn * wi + 2 * tn * 4
                + 2 * bn * tn * jnp.dtype(out_dtype).itemsize + (4 << 20))
        vmem_limit = min(self.vmem_budget,
                         max(need, min(32 << 20, self.vmem_budget)))
        kernel = functools.partial(_linear_kernel, relu=relu)
        return pl.pallas_call(
            kernel,
            out_shape=jax.ShapeDtypeStruct((n_pad, out_p), out_dtype),
            grid_spec=pltpu.PrefetchScalarGridSpec(
                num_scalar_prefetch=0,
                grid=(n_pad // bn, out_p // tn),
                in_specs=[pl.BlockSpec((bn, in_p), lambda i, j: (i, 0)),
                          pl.BlockSpec((in_p, tn), lambda i, j: (0, j)),
                          pl.BlockSpec((1, tn), lambda i, j: (0, j))],
                out_specs=pl.BlockSpec((bn, tn), lambda i, j: (i, j)),
            ),
            compiler_params=pltpu.CompilerParams(
                dimension_semantics=("parallel", "arbitrary"),
                vmem_limit_bytes=int(vmem_limit)),
        )

    def _make_forward(self, n_rows, out_dtype):
        out_itemsize = jnp.dtype(out_dtype).itemsize
        in_dim, in_pad, out_dim = self.in_dim, self.in_pad, self.out_dim
        cdt = self.compute_dtype

        if self.use_streaming:
            bn = self._choose_block_n_streaming(n_rows)
            n_pad = _round_up(max(n_rows, bn), bn)
            calls = []
            for li, (w_p, b_p) in enumerate(self.padded):
                in_p, out_p = int(w_p.shape[0]), int(w_p.shape[1])
                tn = self._choose_tn(in_p, out_p, bn)
                last = (li == self.num_layers - 1)
                calls.append(self._build_layer_call(
                    n_pad, bn, in_p, out_p, tn,
                    relu=self.relu_mask[li],
                    out_dtype=(out_dtype if last else cdt)))

            @jax.jit
            def fwd(x2, layer_params):
                h = jnp.pad(x2.astype(cdt),
                            ((0, n_pad - n_rows), (0, in_pad - in_dim)))
                for call, (w_p, b_p) in zip(calls, layer_params):
                    h = call(h, w_p, b_p)
                return h[:n_rows, :out_dim]

            layer_params = tuple(self.padded)
            return lambda x2: fwd(x2, layer_params)

        # Fused path: all weights resident in VMEM, one pallas_call.
        bn = self._choose_block_n_fused(n_rows, out_itemsize)
        n_pad = _round_up(max(n_rows, bn), bn)
        call = self._build_fused(n_pad, bn, out_dtype,
                                 use_buffered=self._buffered_ok)
        flat = []
        for (w_p, b_p) in self.padded:
            flat += [w_p, b_p]
        flat = tuple(flat)

        @jax.jit
        def fwd(x2, flat_params):
            xp = jnp.pad(x2.astype(cdt),
                         ((0, n_pad - n_rows), (0, in_pad - in_dim)))
            yp = call(xp, *flat_params)
            return yp[:n_rows, :out_dim]

        return lambda x2: fwd(x2, flat)

    # ------------------------- public API -------------------------------------

    def __call__(self, x):
        assert x.shape[-1] == self.in_dim
        out_dtype = jnp.dtype(self.out_dtype) if self.out_dtype is not None else x.dtype
        lead_shape = x.shape[:-1]
        x2 = x.reshape(-1, self.in_dim)
        n = int(x2.shape[0])

        key = (n, out_dtype.name)
        fn = self._call_cache.get(key)
        if fn is None:
            fn = self._make_forward(n, out_dtype)
            self._call_cache[key] = fn
        try:
            out = fn(x2)
        except (TypeError, ValueError, NotImplementedError,
                pltpu.LoweringException):
            # Narrow fallback: only when the single-buffered-weights
            # (pipeline_mode=Buffered(1)) fused build was used.  A genuine
            # failure (e.g. VMEM OOM) reproduces on the rebuilt variant and
            # re-raises instead of being silently swallowed.
            if self.use_streaming or not self._buffered_ok:
                raise
            self._buffered_ok = False
            self._call_cache.clear()
            fn = self._make_forward(n, out_dtype)
            self._call_cache[key] = fn
            out = fn(x2)
        return out.reshape(*lead_shape, self.out_dim)


# ----------------------------- init / reference -------------------------------


def init_linear(key, in_features, out_features):
    """Deterministic init mimicking torch.nn.Linear defaults; W stored (in, out)."""
    kw, kb = jax.random.split(key)
    bound = 1.0 / jnp.sqrt(jnp.float32(in_features))
    w = jax.random.uniform(kw, (in_features, out_features), jnp.float32,
                           minval=-bound, maxval=bound)
    b = jax.random.uniform(kb, (1, out_features), jnp.float32,
                           minval=-bound, maxval=bound)
    return w, b


def build_mlp_params(key, input_size, output_size, hidden_size, num_hiddens):
    """Replicates MLP.__init__ (activation=ReLU, output_activation=Identity)."""
    params, relu_mask = [], []
    keys = jax.random.split(key, num_hiddens + 1)
    in_dim = input_size
    for i in range(num_hiddens):
        params.append(init_linear(keys[i], in_dim, hidden_size))
        relu_mask.append(True)            # hidden Linear always followed by ReLU
        in_dim = hidden_size
    if output_size is not None:
        params.append(init_linear(keys[-1], hidden_size, output_size))
        relu_mask.append(False)           # output Linear, Identity activation
    return params, relu_mask


def mlp_reference(x, params, relu_mask, compute_dtype=jnp.float32):
    """Pure-JAX reference.  compute_dtype=bf16 emulates the kernel's MXU math."""
    h = x.astype(jnp.float32)
    for (w, b), act in zip(params, relu_mask):
        h = jnp.dot(h.astype(compute_dtype), w.astype(compute_dtype),
                    preferred_element_type=jnp.float32) + b.astype(jnp.float32)
        if act:
            h = jnp.maximum(h, 0.0)
    return h.astype(x.dtype)


if __name__ == "__main__":
    key = jax.random.PRNGKey(0)
    k_x, k_p, k_x2 = jax.random.split(key, 3)

    # Shapes consistent with the module defaults:
    # MLP(input_size=32, output_size=64, hidden_size=256, num_hiddens=1).
    N, input_size, hidden_size, output_size, num_hiddens = 16, 32, 256, 64, 1

    x = jax.random.normal(k_x, (N, input_size), dtype=jnp.float32)
    params, relu_mask = build_mlp_params(k_p, input_size, output_size,
                                         hidden_size, num_hiddens)

    mlp = PallasMLP(params, relu_mask)                 # fused, weights resident
    out = jax.block_until_ready(mlp(x))
    assert out.shape == (N, output_size)

    ref_bf16 = mlp_reference(x, params, relu_mask, compute_dtype=jnp.bfloat16)
    ref_f32 = mlp_reference(x, params, relu_mask, compute_dtype=jnp.float32)
    assert jnp.allclose(out, ref_bf16, atol=2e-3, rtol=2e-3), "mismatch vs bf16 ref"
    assert jnp.allclose(out, ref_f32, atol=5e-2, rtol=5e-2), "mismatch vs f32 ref"

    # Multi-tile batch: exercises grid steps + batch padding/slicing.
    x_big = jax.random.normal(k_x2, (300, input_size), dtype=jnp.float32)
    out_big = jax.block_until_ready(mlp(x_big))
    ref_big = mlp_reference(x_big, params, relu_mask, compute_dtype=jnp.bfloat16)
    assert out_big.shape == (300, output_size)
    assert jnp.allclose(out_big, ref_big, atol=2e-3, rtol=2e-3), "mismatch (big batch)"

    # Weight-streaming path (auto-selected when padded weights exceed ~60% of
    # usable VMEM, e.g. wide MLPs on v7x); forced here to validate it.
    mlp_stream = PallasMLP(params, relu_mask, force_streaming=True)
    out_s = jax.block_until_ready(mlp_stream(x))
    assert jnp.allclose(out_s, ref_bf16, atol=2e-3, rtol=2e-3), "mismatch (streaming)"

    print("KERNEL_OK")
</pallas_src>

<mosaic_0001>
module attributes {stable_mosaic.version = 11 : i64} {
  func.func @_fused_mlp_kernel(%arg0: i32, %arg1: memref<16x128xbf16, #tpu.memory_space<vmem>>, %arg2: memref<128x256xbf16, #tpu.memory_space<vmem>>, %arg3: memref<1x256xf32, #tpu.memory_space<vmem>>, %arg4: memref<256x128xbf16, #tpu.memory_space<vmem>>, %arg5: memref<1x128xf32, #tpu.memory_space<vmem>>, %arg6: memref<16x128xf32, #tpu.memory_space<vmem>>) attributes {dimension_semantics = [#tpu.dimension_semantics<parallel>], iteration_bounds = array<i64: 1>, scalar_prefetch = 0 : i64, scratch_operands = 0 : i64, tpu.core_type = #tpu.core_type<tc>, window_params = [{transform_indices = @transform_0, window_bounds = array<i64: 16, 128>}, {pipeline_mode = #tpu.pipeline_mode<synchronous>, transform_indices = @transform_1, window_bounds = array<i64: 128, 256>}, {pipeline_mode = #tpu.pipeline_mode<synchronous>, transform_indices = @transform_2, window_bounds = array<i64: 1, 256>}, {pipeline_mode = #tpu.pipeline_mode<synchronous>, transform_indices = @transform_3, window_bounds = array<i64: 256, 128>}, {pipeline_mode = #tpu.pipeline_mode<synchronous>, transform_indices = @transform_4, window_bounds = array<i64: 1, 128>}, {transform_indices = @transform_5, window_bounds = array<i64: 16, 128>}]} {
    %c0 = arith.constant 0 : index
    %c0_0 = arith.constant 0 : index
    %0 = vector.load %arg1[%c0, %c0_0] : memref<16x128xbf16, #tpu.memory_space<vmem>>, vector<16x128xbf16>
    %c0_1 = arith.constant 0 : index
    %c0_2 = arith.constant 0 : index
    %1 = vector.load %arg2[%c0_1, %c0_2] : memref<128x256xbf16, #tpu.memory_space<vmem>>, vector<128x256xbf16>
    %cst = arith.constant dense<0.000000e+00> : vector<16x256xf32>
    %2 = tpu.matmul %0, %1, %cst {dimension_numbers = #tpu.dot_dimension_numbers<[1], [0], [0], [1], [0, 0, 1, 1], [], []>} : vector<16x128xbf16>, vector<128x256xbf16>, vector<16x256xf32> -> vector<16x256xf32>
    %c0_3 = arith.constant 0 : index
    %c0_4 = arith.constant 0 : index
    %3 = vector.load %arg3[%c0_3, %c0_4] : memref<1x256xf32, #tpu.memory_space<vmem>>, vector<1x256xf32>
    %4 = vector.broadcast %3 : vector<1x256xf32> to vector<16x256xf32>
    %5 = arith.addf %2, %4 : vector<16x256xf32>
    %cst_5 = arith.constant 0.000000e+00 : f32
    %6 = vector.broadcast %cst_5 : f32 to vector<16x256xf32>
    %7 = arith.maximumf %5, %6 : vector<16x256xf32>
    %8 = arith.truncf %7 : vector<16x256xf32> to vector<16x256xbf16>
    %c0_6 = arith.constant 0 : index
    %c0_7 = arith.constant 0 : index
    %9 = vector.load %arg4[%c0_6, %c0_7] : memref<256x128xbf16, #tpu.memory_space<vmem>>, vector<256x128xbf16>
    %cst_8 = arith.constant dense<0.000000e+00> : vector<16x128xf32>
    %10 = tpu.matmul %8, %9, %cst_8 {dimension_numbers = #tpu.dot_dimension_numbers<[1], [0], [0], [1], [0, 0, 1, 1], [], []>} : vector<16x256xbf16>, vector<256x128xbf16>, vector<16x128xf32> -> vector<16x128xf32>
    %c0_9 = arith.constant 0 : index
    %c0_10 = arith.constant 0 : index
    %11 = vector.load %arg5[%c0_9, %c0_10] : memref<1x128xf32, #tpu.memory_space<vmem>>, vector<1x128xf32>
    %12 = vector.broadcast %11 : vector<1x128xf32> to vector<16x128xf32>
    %13 = arith.addf %10, %12 : vector<16x128xf32>
    %c0_11 = arith.constant 0 : index
    %c0_12 = arith.constant 0 : index
    %14 = vector.load %arg6[%c0_11, %c0_12] : memref<16x128xf32, #tpu.memory_space<vmem>>, vector<16x128xf32>
    tpu.vector_store %arg6[%c0_11, %c0_12], %13 {strides = array<i32>} : memref<16x128xf32, #tpu.memory_space<vmem>>, vector<16x128xf32>,
    return
  }
  func.func @transform_0(%arg0: i32) -> (i32, i32) {
    %c0_i32 = arith.constant 0 : i32
    %c0_i32_0 = arith.constant 0 : i32
    return %arg0, %c0_i32 : i32, i32
  }
  func.func @transform_1(%arg0: i32) -> (i32, i32) {
    %c0_i32 = arith.constant 0 : i32
    %c0_i32_0 = arith.constant 0 : i32
    %c0_i32_1 = arith.constant 0 : i32
    return %c0_i32, %c0_i32_0 : i32, i32
  }
  func.func @transform_2(%arg0: i32) -> (i32, i32) {
    %c0_i32 = arith.constant 0 : i32
    %c0_i32_0 = arith.constant 0 : i32
    %c0_i32_1 = arith.constant 0 : i32
    return %c0_i32, %c0_i32_0 : i32, i32
  }
  func.func @transform_3(%arg0: i32) -> (i32, i32) {
    %c0_i32 = arith.constant 0 : i32
    %c0_i32_0 = arith.constant 0 : i32
    %c0_i32_1 = arith.constant 0 : i32
    return %c0_i32, %c0_i32_0 : i32, i32
  }
  func.func @transform_4(%arg0: i32) -> (i32, i32) {
    %c0_i32 = arith.constant 0 : i32
    %c0_i32_0 = arith.constant 0 : i32
    %c0_i32_1 = arith.constant 0 : i32
    return %c0_i32, %c0_i32_0 : i32, i32
  }
  func.func @transform_5(%arg0: i32) -> (i32, i32) {
    %c0_i32 = arith.constant 0 : i32
    %c0_i32_0 = arith.constant 0 : i32
    return %arg0, %c0_i32 : i32, i32
  }
}

</mosaic_0001>

<llo_original>
// kernel: fwd.1
$region0: #{fwd.1}
  #allocation0 [shape = 'u32[]', space=smem, size = 0x4, offset = 0x4, fixed_abs, tag = 'smem constant byte address 0x4 - core index']
  #allocation1 [shape = 'u32[72,128]{1,0:T(1,128)}', space=vmem, size = 0x9000, scoped, tag = 'internal scratch']
  %s0 = inlined_call_operand.vmem [shape: bf16[16,128], index: 0, kind: input, shape index: {}]
  %s1 = inlined_call_operand.hbm [shape: bf16[128,256], index: 1, kind: input, shape index: {}]
  %s2 = inlined_call_operand.vmem [shape: f32[1,256], index: 2, kind: input, shape index: {}]
  %s3 = inlined_call_operand.hbm [shape: bf16[256,128], index: 3, kind: input, shape index: {}]
  %s4 = inlined_call_operand.vmem [shape: f32[1,128], index: 4, kind: input, shape index: {}]
  %s5 = inlined_call_operand.hbm [shape: f32[16,128], index: 5, kind: output, shape index: {}]
  %s6 = sld [smem:[#allocation0]]
  $region38: #{fwd.1} parent=0
    _
  %s8 = ssub.s32 1, %s6
  %s9 = scalar_select 0, %s8, %s6
  $region1: #{fwd.1} parent=0
    #allocation2 [shape = 'u8[65536]{0}', space=vmem, size = 0x10000, scoped, tag = 'input window, operand 1, single buffered']
    #allocation3 [shape = 's32[1]{0}', space=sflag, size = 0x4, scoped, tag = 'scoped memory for fwd.1']
    #allocation4 [shape = 's32[1]{0}', space=sflag, size = 0x4, scoped, tag = 'scoped memory for fwd.1']
    #allocation5 [shape = 'u8[65536]{0}', space=vmem, size = 0x10000, scoped, tag = 'input window, operand 3, single buffered']
    #allocation6 [shape = 's32[1]{0}', space=sflag, size = 0x4, scoped, tag = 'scoped memory for fwd.1']
    #allocation7 [shape = 'u8[8192]{0}', space=vmem, size = 0x2000, scoped, tag = 'output window, operand 0, single buffered']
    %10 = vsyncpa [#allocation3], 0
    %11 = vsyncpa [#allocation6], 0
    %12 = vsyncpa [#allocation4], 0
    // Predicated region
    $region2: #{fwd.1} parent=1 // pred_check
      _
    $region3: #{fwd.1} parent=1 // pred_check_branch
      %14 = sbr.rel (0) target = $region5
    $region4: #{fwd.1} parent=1 // pred_region
      _
    $region5: #{fwd.1} parent=1 // pred_fallthru
      _
    // Predicated region
    $region6: #{fwd.1} parent=1 // pred_check
      _
    $region7: #{fwd.1} parent=1 // pred_check_branch
      %16 = sbr.rel (0) target = $region9
    $region8: #{fwd.1} parent=1 // pred_region
      %18 = vsyncadd [#allocation3], 0
      %s19 = sshll.u32 %s1, 4
      %s20 = int_to_ptr.hbm [resolvable:$true] %s19
      %s21 = sshll.u32 [#allocation2], 4
      %s22 = int_to_ptr.vmem [resolvable:$true] %s21
      %27 = dma.hbm_to_vmem [thread:$0]  %s20, 2048, %s22, [#allocation3], 128, 128, 8
    $region9: #{fwd.1} parent=1 // pred_fallthru
      _
    // Predicated region
    $region10: #{fwd.1} parent=1 // pred_check
      _
    $region11: #{fwd.1} parent=1 // pred_check_branch
      %29 = sbr.rel (0) target = $region13
    $region12: #{fwd.1} parent=1 // pred_region
      _
    $region13: #{fwd.1} parent=1 // pred_fallthru
      _
    // Predicated region
    $region14: #{fwd.1} parent=1 // pred_check
      _
    $region15: #{fwd.1} parent=1 // pred_check_branch
      %31 = sbr.rel (0) target = $region17
    $region16: #{fwd.1} parent=1 // pred_region
      %33 = vsyncadd [#allocation6], 0
      %s34 = sshll.u32 %s3, 4
      %s35 = int_to_ptr.hbm [resolvable:$true] %s34
      %s36 = sshll.u32 [#allocation5], 4
      %s37 = int_to_ptr.vmem [resolvable:$true] %s36
      %42 = dma.hbm_to_vmem [thread:$0]  %s35, 2048, %s37, [#allocation6], 64, 64, 4
    $region17: #{fwd.1} parent=1 // pred_fallthru
      _
    // Predicated region
    $region18: #{fwd.1} parent=1 // pred_check
      _
    $region19: #{fwd.1} parent=1 // pred_check_branch
      %44 = sbr.rel (0) target = $region21
    $region20: #{fwd.1} parent=1 // pred_region
      _
    $region21: #{fwd.1} parent=1 // pred_fallthru
      _
    // Predicated region
    $region22: #{fwd.1} parent=1 // pred_check
      _
    $region23: #{fwd.1} parent=1 // pred_check_branch
      %46 = sbr.rel (0) target = $region25
    $region24: #{fwd.1} parent=1 // pred_region
      %48 = dma.done [#allocation3], 2048
    $region25: #{fwd.1} parent=1 // pred_fallthru
      _
    // Predicated region
    $region26: #{fwd.1} parent=1 // pred_check
      _
    $region27: #{fwd.1} parent=1 // pred_check_branch
      %50 = sbr.rel (0) target = $region29
    $region28: #{fwd.1} parent=1 // pred_region
      %52 = dma.done [#allocation6], 2048
    $region29: #{fwd.1} parent=1 // pred_fallthru
      _
    %v53 = vld [vmem:[%s0] sm:$0xf]
    %v54 = vld [vmem:[%s0 + $0x4] sm:$0xf]
    %v55 = vld [vmem:[#allocation2] sm:$0xff]
    %v56 = vld [vmem:[#allocation2 + $0x8] sm:$0xff]
    %v57 = vld [vmem:[#allocation2 + $0x10] sm:$0xff]
    %v58 = vld [vmem:[#allocation2 + $0x18] sm:$0xff]
    %v59 = vld [vmem:[#allocation2 + $0x20] sm:$0xff]
    %v60 = vld [vmem:[#allocation2 + $0x28] sm:$0xff]
    %v61 = vld [vmem:[#allocation2 + $0x30] sm:$0xff]
    %v62 = vld [vmem:[#allocation2 + $0x38] sm:$0xff]
    %v63 = vld [vmem:[#allocation2 + $0x40] sm:$0xff]
    %v64 = vld [vmem:[#allocation2 + $0x48] sm:$0xff]
    %v65 = vld [vmem:[#allocation2 + $0x50] sm:$0xff]
    %v66 = vld [vmem:[#allocation2 + $0x58] sm:$0xff]
    %v67 = vld [vmem:[#allocation2 + $0x60] sm:$0xff]
    %v68 = vld [vmem:[#allocation2 + $0x68] sm:$0xff]
    %v69 = vld [vmem:[#allocation2 + $0x70] sm:$0xff]
    %v70 = vld [vmem:[#allocation2 + $0x78] sm:$0xff]
    %v71 = vld [vmem:[%s2] sm:$0x3]
    %v73 = vperm.slane %v71, 0
    %v74 = vperm.slane %v71, 1
    %v79 = vunpack.c.l.b16 %v53
    %v80 = vunpack.c.l.b16 %v54
    %v81 = vpack.c.b16 %v80, %v79
    %v99 = vunpack.c.l.b16 %v55
    %v100 = vunpack.c.h.b16 %v55
    %v101 = vunpack.c.l.b16 %v56
    %v102 = vunpack.c.h.b16 %v56
    %v103 = vunpack.c.l.b16 %v57
    %v104 = vunpack.c.h.b16 %v57
    %v105 = vunpack.c.l.b16 %v58
    %v106 = vunpack.c.h.b16 %v58
    %v107 = vunpack.c.l.b16 %v59
    %v108 = vunpack.c.h.b16 %v59
    %v109 = vunpack.c.l.b16 %v60
    %v110 = vunpack.c.h.b16 %v60
    %v111 = vunpack.c.l.b16 %v61
    %v112 = vunpack.c.h.b16 %v61
    %v113 = vunpack.c.l.b16 %v62
    %v114 = vunpack.c.h.b16 %v62
    %v115 = vunpack.c.l.b16 %v63
    %v116 = vunpack.c.h.b16 %v63
    %v117 = vunpack.c.l.b16 %v64
    %v118 = vunpack.c.h.b16 %v64
    %v119 = vunpack.c.l.b16 %v65
    %v120 = vunpack.c.h.b16 %v65
    %v121 = vunpack.c.l.b16 %v66
    %v122 = vunpack.c.h.b16 %v66
    %v123 = vunpack.c.l.b16 %v67
    %v124 = vunpack.c.h.b16 %v67
    %v125 = vunpack.c.l.b16 %v68
    %v126 = vunpack.c.h.b16 %v68
    %v127 = vunpack.c.l.b16 %v69
    %v128 = vunpack.c.h.b16 %v69
    %v129 = vunpack.c.l.b16 %v70
    %v130 = vunpack.c.h.b16 %v70
    %v131 = vpack.c.b16 %v101, %v99
    %v132 = vpack.c.b16 %v102, %v100
    %v133 = vpack.c.b16 %v105, %v103
    %v134 = vpack.c.b16 %v106, %v104
    %v135 = vpack.c.b16 %v109, %v107
    %v136 = vpack.c.b16 %v110, %v108
    %v137 = vpack.c.b16 %v113, %v111
    %v138 = vpack.c.b16 %v114, %v112
    %v139 = vpack.c.b16 %v117, %v115
    %v140 = vpack.c.b16 %v118, %v116
    %v141 = vpack.c.b16 %v121, %v119
    %v142 = vpack.c.b16 %v122, %v120
    %v143 = vpack.c.b16 %v125, %v123
    %v144 = vpack.c.b16 %v126, %v124
    %v145 = vpack.c.b16 %v129, %v127
    %v146 = vpack.c.b16 %v130, %v128
    %163 = vmatpush.bf16.msra.mxu0 %v145
    %164 = vmatpush.bf16.msra.mxu0 %v143
    %165 = vmatpush.bf16.msra.mxu0 %v141
    %166 = vmatpush.bf16.msra.mxu0 %v139
    %167 = vmatpush.bf16.msra.mxu0 %v137
    %168 = vmatpush.bf16.msra.mxu0 %v135
    %169 = vmatpush.bf16.msra.mxu0 %v133
    %170 = vmatpush.bf16.msra.mxu0 %v131
    %171 = vmatmul.bf16.gmra.mxu0 %v81
    %v172 = vpop.f32.mrf.mxu0
    %v173 = vadd.f32 %v73, %v172
    %v174 = vpop.f32.mrf.mxu0
    %v175 = vadd.f32 %v73, %v174
    %176 = vdwg.mxu0
    %177 = vmatpush.bf16.msra.mxu0 %v146
    %178 = vmatpush.bf16.msra.mxu0 %v144
    %179 = vmatpush.bf16.msra.mxu0 %v142
    %180 = vmatpush.bf16.msra.mxu0 %v140
    %181 = vmatpush.bf16.msra.mxu0 %v138
    %182 = vmatpush.bf16.msra.mxu0 %v136
    %183 = vmatpush.bf16.msra.mxu0 %v134
    %184 = vmatpush.bf16.msra.mxu0 %v132
    %185 = vmatmul.bf16.gmra.mxu0 %v81
    %v186 = vpop.f32.mrf.mxu0
    %v187 = vadd.f32 %v74, %v186
    %v188 = vpop.f32.mrf.mxu0
    %v189 = vadd.f32 %v74, %v188
    %190 = vdwg.mxu0
    %v191 = vmax.f32 %v173, 0.0
    %v192 = vmax.f32 %v187, 0.0
    %v193 = vmax.f32 %v175, 0.0
    %v194 = vmax.f32 %v189, 0.0
    %v195 = vpack.c.bf16 %v193, %v191
    %v196 = vpack.c.bf16 %v194, %v192
    %v197 = vld [vmem:[#allocation5] sm:$0xf]
    %v198 = vld [vmem:[#allocation5 + $0x4] sm:$0xf]
    %v199 = vld [vmem:[#allocation5 + $0x8] sm:$0xf]
    %v200 = vld [vmem:[#allocation5 + $0xc] sm:$0xf]
    %v201 = vld [vmem:[#allocation5 + $0x10] sm:$0xf]
    %v202 = vld [vmem:[#allocation5 + $0x14] sm:$0xf]
    %v203 = vld [vmem:[#allocation5 + $0x18] sm:$0xf]
    %v204 = vld [vmem:[#allocation5 + $0x1c] sm:$0xf]
    %v205 = vld [vmem:[#allocation5 + $0x20] sm:$0xf]
    %v206 = vld [vmem:[#allocation5 + $0x24] sm:$0xf]
    %v207 = vld [vmem:[#allocation5 + $0x28] sm:$0xf]
    %v208 = vld [vmem:[#allocation5 + $0x2c] sm:$0xf]
    %v209 = vld [vmem:[#allocation5 + $0x30] sm:$0xf]
    %v210 = vld [vmem:[#allocation5 + $0x34] sm:$0xf]
    %v211 = vld [vmem:[#allocation5 + $0x38] sm:$0xf]
    %v212 = vld [vmem:[#allocation5 + $0x3c] sm:$0xf]
    %v213 = vld [vmem:[#allocation5 + $0x40] sm:$0xf]
    %v214 = vld [vmem:[#allocation5 + $0x44] sm:$0xf]
    %v215 = vld [vmem:[#allocation5 + $0x48] sm:$0xf]
    %v216 = vld [vmem:[#allocation5 + $0x4c] sm:$0xf]
    %v217 = vld [vmem:[#allocation5 + $0x50] sm:$0xf]
    %v218 = vld [vmem:[#allocation5 + $0x54] sm:$0xf]
    %v219 = vld [vmem:[#allocation5 + $0x58] sm:$0xf]
    %v220 = vld [vmem:[#allocation5 + $0x5c] sm:$0xf]
    %v221 = vld [vmem:[#allocation5 + $0x60] sm:$0xf]
    %v222 = vld [vmem:[#allocation5 + $0x64] sm:$0xf]
    %v223 = vld [vmem:[#allocation5 + $0x68] sm:$0xf]
    %v224 = vld [vmem:[#allocation5 + $0x6c] sm:$0xf]
    %v225 = vld [vmem:[#allocation5 + $0x70] sm:$0xf]
    %v226 = vld [vmem:[#allocation5 + $0x74] sm:$0xf]
    %v227 = vld [vmem:[#allocation5 + $0x78] sm:$0xf]
    %v228 = vld [vmem:[#allocation5 + $0x7c] sm:$0xf]
    %v229 = vld [vmem:[%s4] sm:$0x1]
    %v231 = vperm.slane %v229, 0
    %v265 = vunpack.c.l.b16 %v197
    %v266 = vunpack.c.l.b16 %v198
    %v267 = vunpack.c.l.b16 %v199
    %v268 = vunpack.c.l.b16 %v200
    %v269 = vunpack.c.l.b16 %v201
    %v270 = vunpack.c.l.b16 %v202
    %v271 = vunpack.c.l.b16 %v203
    %v272 = vunpack.c.l.b16 %v204
    %v273 = vunpack.c.l.b16 %v205
    %v274 = vunpack.c.l.b16 %v206
    %v275 = vunpack.c.l.b16 %v207
    %v276 = vunpack.c.l.b16 %v208
    %v277 = vunpack.c.l.b16 %v209
    %v278 = vunpack.c.l.b16 %v210
    %v279 = vunpack.c.l.b16 %v211
    %v280 = vunpack.c.l.b16 %v212
    %v281 = vunpack.c.l.b16 %v213
    %v282 = vunpack.c.l.b16 %v214
    %v283 = vunpack.c.l.b16 %v215
    %v284 = vunpack.c.l.b16 %v216
    %v285 = vunpack.c.l.b16 %v217
    %v286 = vunpack.c.l.b16 %v218
    %v287 = vunpack.c.l.b16 %v219
    %v288 = vunpack.c.l.b16 %v220
    %v289 = vunpack.c.l.b16 %v221
    %v290 = vunpack.c.l.b16 %v222
    %v291 = vunpack.c.l.b16 %v223
    %v292 = vunpack.c.l.b16 %v224
    %v293 = vunpack.c.l.b16 %v225
    %v294 = vunpack.c.l.b16 %v226
    %v295 = vunpack.c.l.b16 %v227
    %v296 = vunpack.c.l.b16 %v228
    %v297 = vpack.c.b16 %v266, %v265
    %v298 = vpack.c.b16 %v268, %v267
    %v299 = vpack.c.b16 %v270, %v269
    %v300 = vpack.c.b16 %v272, %v271
    %v301 = vpack.c.b16 %v274, %v273
    %v302 = vpack.c.b16 %v276, %v275
    %v303 = vpack.c.b16 %v278, %v277
    %v304 = vpack.c.b16 %v280, %v279
    %v305 = vpack.c.b16 %v282, %v281
    %v306 = vpack.c.b16 %v284, %v283
    %v307 = vpack.c.b16 %v286, %v285
    %v308 = vpack.c.b16 %v288, %v287
    %v309 = vpack.c.b16 %v290, %v289
    %v310 = vpack.c.b16 %v292, %v291
    %v311 = vpack.c.b16 %v294, %v293
    %v312 = vpack.c.b16 %v296, %v295
    %329 = vmatpush.bf16.msra.mxu0 %v304
    %330 = vmatpush.bf16.msra.mxu0 %v303
    %331 = vmatpush.bf16.msra.mxu0 %v302
    %332 = vmatpush.bf16.msra.mxu0 %v301
    %333 = vmatpush.bf16.msra.mxu0 %v300
    %334 = vmatpush.bf16.msra.mxu0 %v299
    %335 = vmatpush.bf16.msra.mxu0 %v298
    %336 = vmatpush.bf16.msra.mxu0 %v297
    %337 = vmatmul.bf16.gmra.mxu0 %v195
    %v338 = vpop.f32.mrf.mxu0
    %v339 = vadd.f32 %v231, %v338
    %v340 = vpop.f32.mrf.mxu0
    %v341 = vadd.f32 %v231, %v340
    %342 = vdwg.mxu0
    %343 = vmatpush.bf16.msra.mxu0 %v312
    %344 = vmatpush.bf16.msra.mxu0 %v311
    %345 = vmatpush.bf16.msra.mxu0 %v310
    %346 = vmatpush.bf16.msra.mxu0 %v309
    %347 = vmatpush.bf16.msra.mxu0 %v308
    %348 = vmatpush.bf16.msra.mxu0 %v307
    %349 = vmatpush.bf16.msra.mxu0 %v306
    %350 = vmatpush.bf16.msra.mxu0 %v305
    %351 = vmatmul.bf16.gmra.mxu0 %v196
    %v352 = vpop.f32.mrf.mxu0
    %v353 = vadd.f32 %v339, %v352
    %v354 = vpop.f32.mrf.mxu0
    %v355 = vadd.f32 %v341, %v354
    %356 = vdwg.mxu0
    %357 = vst [vmem:[#allocation7] sm:$0xff] %v353
    %358 = vst [vmem:[#allocation7 + $0x8] sm:$0xff] %v355
    // Predicated region
    $region30: #{fwd.1} parent=1 // pred_check
      _
    $region31: #{fwd.1} parent=1 // pred_check_branch
      %360 = sbr.rel (0) target = $region33
    $region32: #{fwd.1} parent=1 // pred_region
      %362 = vsyncadd [#allocation4], 0
      %s363 = sshll.u32 [#allocation7], 4
      %s364 = int_to_ptr.vmem [resolvable:$true] %s363
      %s365 = sshll.u32 %s5, 4
      %s366 = int_to_ptr.hbm [resolvable:$true] %s365
      %371 = dma.vmem_to_hbm [thread:$0]  %s364, 256, %s366, [#allocation4], 128, 128, 8
    $region33: #{fwd.1} parent=1 // pred_fallthru
      _
    // Predicated region
    $region34: #{fwd.1} parent=1 // pred_check
      _
    $region35: #{fwd.1} parent=1 // pred_check_branch
      %373 = sbr.rel (0) target = $region37
    $region36: #{fwd.1} parent=1 // pred_region
      %375 = dma.done [#allocation4], 256
    $region37: #{fwd.1} parent=1 // pred_fallthru
      _
    %376 = vsyncpa [#allocation3], 1
    %377 = vsyncpa [#allocation6], 1
    %378 = vsyncpa [#allocation4], 1

</llo_original>
